<compile_context>
chip_gen: v6e
topology: v6e:2x2x1
jax: 0.10.0
libtpu: 0.0.40
codegen_flags: <defaults>
</compile_context>

<pallas_src>
import functools
import math

import jax
import jax.numpy as jnp
from jax.experimental import pallas as pl
from jax.experimental.pallas import tpu as pltpu


def _round_up(n, m):
    return ((n + m - 1) // m) * m


def _scale_rows_matmul(scale_row, w):
    """Compute diag(scale_row) @ w (scale row i of w by scale_row[0, i]).

    Implemented as an iota-masked diagonal + MXU matmul: avoids the
    (1, F) -> (F, 1) relayout a `scale_row.reshape(-1, 1) * w` would need,
    and the extra (F, F) @ (F, F_out) matmul is negligible next to the
    (B, F) @ (F, F_out) matmul whose elementwise pre-passes it eliminates.
    """
    f = w.shape[0]
    ri = jax.lax.broadcasted_iota(jnp.int32, (f, f), 0)
    ci = jax.lax.broadcasted_iota(jnp.int32, (f, f), 1)
    diag = jnp.where(ri == ci, jnp.broadcast_to(scale_row, (f, f)), 0.0)
    return jnp.dot(diag.astype(jnp.bfloat16), w,
                   preferred_element_type=jnp.float32)


def _reducer_kernel(x_ref,
                    w1_ref, b1_ref, g1_ref, be1_ref,
                    w2_ref, b2_ref, g2_ref, be2_ref,
                    w3_ref, b3_ref,
                    o_ref, *, k_used):
    """Full MLP (Linear->ReLU->BN x2, Linear) in one VMEM-resident kernel."""
    eps = jnp.float32(1e-5)
    batch = x_ref.shape[0]
    inv_b = jnp.float32(1.0 / batch)
    # TODO(synk): PyTorch BatchNorm1d in training mode raises on batch size 1;
    # this kernel silently normalizes with var=0 in that case.

    # In-kernel truncate/pad glue + bf16 cast (no extra XLA ops in the wrapper):
    #  - x wider than input_size  -> use only its first k_used columns
    #  - x narrower than input_size -> zero-padding x is equivalent to using
    #    only the first k_used rows of w1.
    x = x_ref[:, :k_used] if k_used < x_ref.shape[1] else x_ref[...]
    w1 = w1_ref[:k_used, :] if k_used < w1_ref.shape[0] else w1_ref[...]
    x = x.astype(jnp.bfloat16)

    # ---- Stage 1: Linear -> ReLU ----
    h = jnp.dot(x, w1, preferred_element_type=jnp.float32) + b1_ref[...]
    h = jnp.maximum(h, 0.0)

    # BatchNorm1d batch statistics (biased variance), f32 one-pass moments.
    mu = jnp.sum(h, axis=0, keepdims=True) * inv_b            # E[h]    (1, h1_p)
    m2 = jnp.sum(h * h, axis=0, keepdims=True) * inv_b        # E[h^2]  (1, h1_p)
    var = jnp.maximum(m2 - mu * mu, 0.0)
    a = g1_ref[...] * jax.lax.rsqrt(var + eps)                # EUP rsqrt
    c = be1_ref[...] - mu * a

    # Fold the BN affine into the next Linear (no (B, h1_p) normalize passes):
    #   (h*a + c) @ W2 + b2 == h @ (diag(a) @ W2) + (c @ W2 + b2)
    w2s = _scale_rows_matmul(a, w2_ref[...]).astype(jnp.bfloat16)
    b2e = b2_ref[...] + jnp.dot(c.astype(jnp.bfloat16), w2_ref[...],
                                preferred_element_type=jnp.float32)

    # ---- Stage 2: Linear -> ReLU ----
    h = jnp.dot(h.astype(jnp.bfloat16), w2s,
                preferred_element_type=jnp.float32) + b2e
    h = jnp.maximum(h, 0.0)

    mu = jnp.sum(h, axis=0, keepdims=True) * inv_b
    m2 = jnp.sum(h * h, axis=0, keepdims=True) * inv_b
    var = jnp.maximum(m2 - mu * mu, 0.0)
    a = g2_ref[...] * jax.lax.rsqrt(var + eps)
    c = be2_ref[...] - mu * a

    w3s = _scale_rows_matmul(a, w3_ref[...]).astype(jnp.bfloat16)
    b3e = b3_ref[...] + jnp.dot(c.astype(jnp.bfloat16), w3_ref[...],
                                preferred_element_type=jnp.float32)

    # ---- Stage 3: final Linear, stored at the logical output width ----
    out = jnp.dot(h.astype(jnp.bfloat16), w3s,
                  preferred_element_type=jnp.float32) + b3e
    o_ref[...] = out.astype(o_ref.dtype)


@functools.partial(jax.jit, static_argnames=("input_size", "output_size"))
def state_dimensionality_reducer(x, params, *, input_size, output_size=32):
    """JAX wrapper reproducing StateDimensionalityReducer.forward semantics."""
    # --- minimal shape glue (matches the PyTorch forward) ---
    if x.ndim == 1:
        x = x[None, :]
    if x.ndim > 2:
        x = x.reshape(x.shape[0], -1)
    if not jnp.issubdtype(x.dtype, jnp.floating):
        x = x.astype(jnp.float32)      # torch's x.float(); skipped when already fp
    # Truncate/zero-pad to input_size and the bf16 cast happen inside the kernel.

    (w1, b1, g1, be1, w2, b2, g2, be2, w3, b3) = params
    batch, x_width = x.shape
    in_f, h1_p = w1.shape
    h2_p = w2.shape[1]
    out_f = w3.shape[1]
    k_used = min(x_width, in_f)

    # Cost hint so XLA schedules around this tiny custom call.
    flops = 2 * batch * (k_used * h1_p + h1_p * h2_p + h2_p * out_f)
    flops += 2 * (h1_p * h1_p * h2_p + h2_p * h2_p * out_f)      # BN-fold matmuls
    flops += 2 * (h1_p * h2_p + h2_p * out_f)                    # bias matvecs
    transcendentals = h1_p + h2_p
    param_bytes = sum(int(p.size) * p.dtype.itemsize for p in params)
    x_bytes = int(x.size) * x.dtype.itemsize
    bytes_accessed = x_bytes + param_bytes + batch * out_f * 4

    # Explicit VMEM budget: v5e default scoped limit is only 16 MiB; keep the
    # request well under v7x's 64 MiB physical VMEM.
    act_bytes = batch * (x_width * 2 + (h1_p + h2_p) * 6 + out_f * 4)
    fold_bytes = 4 * (h1_p * h1_p + 2 * h1_p * h2_p + h2_p * h2_p + 2 * h2_p * out_f)
    vmem_bytes = 2 * (x_bytes + param_bytes + act_bytes + fold_bytes) + (4 << 20)
    vmem_bytes = max(16 << 20, min(int(vmem_bytes), 48 << 20))

    vmem_spec = pl.BlockSpec(memory_space=pltpu.MemorySpace.VMEM)

    return pl.pallas_call(
        functools.partial(_reducer_kernel, k_used=k_used),
        out_shape=jax.ShapeDtypeStruct((batch, out_f), jnp.float32),
        in_specs=[vmem_spec] * 11,
        out_specs=vmem_spec,
        compiler_params=pltpu.CompilerParams(vmem_limit_bytes=vmem_bytes),
        cost_estimate=pl.CostEstimate(
            flops=flops,
            transcendentals=transcendentals,
            bytes_accessed=bytes_accessed,
        ),
    )(x, w1, b1, g1, be1, w2, b2, g2, be2, w3, b3)


def init_params(key, input_size, output_size=32):
    """Parameter init mirroring nn.Linear / nn.BatchNorm1d defaults.

    Hidden widths are lane-padded to multiples of 128 (160->256, 80->128) so
    activation vregs stay lane-dense; layer-1 keeps K = input_size (the MXU
    pads K < 128 internally) and layer-3 keeps the true output width.
    Weights are bf16 (in, out) so the hot path is x @ W; biases / BN params
    are f32 (1, out).  Padded rows/cols/biases are zero and BN gamma is zero
    on padded lanes, so padded lanes stay exactly zero through every stage.
    """
    h1 = max(input_size, 160)
    h2 = max(input_size // 2, 80)
    sizes = [input_size, h1, h2, output_size]
    padded_in = [input_size, _round_up(h1, 128), _round_up(h2, 128)]
    padded_out = [_round_up(h1, 128), _round_up(h2, 128), output_size]

    keys = jax.random.split(key, 6)
    params = []
    for i in range(3):
        fi, fo = sizes[i], sizes[i + 1]
        fip, fop = padded_in[i], padded_out[i]
        bound = 1.0 / math.sqrt(fi)
        w = jax.random.uniform(keys[2 * i], (fi, fo),
                               minval=-bound, maxval=bound, dtype=jnp.float32)
        b = jax.random.uniform(keys[2 * i + 1], (fo,),
                               minval=-bound, maxval=bound, dtype=jnp.float32)
        w_p = jnp.zeros((fip, fop), jnp.float32).at[:fi, :fo].set(w)
        b_p = jnp.zeros((1, fop), jnp.float32).at[0, :fo].set(b)
        params.append(w_p.astype(jnp.bfloat16))
        params.append(b_p)
        if i < 2:
            # BatchNorm1d defaults: weight=1, bias=0 on real lanes; 0 on padded.
            params.append(jnp.zeros((1, fop), jnp.float32).at[0, :fo].set(1.0))
            params.append(jnp.zeros((1, fop), jnp.float32))
    return tuple(params)  # (w1,b1,g1,be1, w2,b2,g2,be2, w3,b3)


if __name__ == "__main__":
    INPUT_SIZE = 64
    OUTPUT_SIZE = 32

    key = jax.random.PRNGKey(0)
    k_param, k_x = jax.random.split(key)

    params = init_params(k_param, INPUT_SIZE, OUTPUT_SIZE)

    # NCHW-style input; flattens to (2, 1024) then truncates to input_size=64
    # inside the kernel.
    x = jax.random.normal(k_x, (2, 4, 16, 16), dtype=jnp.float32)

    out = state_dimensionality_reducer(
        x, params, input_size=INPUT_SIZE, output_size=OUTPUT_SIZE)
    out = jax.block_until_ready(out)

    assert out.shape == (2, OUTPUT_SIZE)
    assert out.dtype == jnp.float32
    assert bool(jnp.all(jnp.isfinite(out)))
    print("KERNEL_OK")
</pallas_src>

<mosaic_0001>
module attributes {stable_mosaic.version = 11 : i64} {
  func.func @_reducer_kernel(%arg0: memref<2x1024xf32, #tpu.memory_space<vmem>>, %arg1: memref<64x256xbf16, #tpu.memory_space<vmem>>, %arg2: memref<1x256xf32, #tpu.memory_space<vmem>>, %arg3: memref<1x256xf32, #tpu.memory_space<vmem>>, %arg4: memref<1x256xf32, #tpu.memory_space<vmem>>, %arg5: memref<256x128xbf16, #tpu.memory_space<vmem>>, %arg6: memref<1x128xf32, #tpu.memory_space<vmem>>, %arg7: memref<1x128xf32, #tpu.memory_space<vmem>>, %arg8: memref<1x128xf32, #tpu.memory_space<vmem>>, %arg9: memref<128x32xbf16, #tpu.memory_space<vmem>>, %arg10: memref<1x32xf32, #tpu.memory_space<vmem>>, %arg11: memref<2x32xf32, #tpu.memory_space<vmem>>) attributes {dimension_semantics = [], scalar_prefetch = 0 : i64, scratch_operands = 0 : i64, tpu.core_type = #tpu.core_type<tc>} {
    %c0 = arith.constant 0 : index
    %c0_0 = arith.constant 0 : index
    %0 = vector.load %arg0[%c0, %c0_0] : memref<2x1024xf32, #tpu.memory_space<vmem>>, vector<2x64xf32>
    %c0_1 = arith.constant 0 : index
    %c0_2 = arith.constant 0 : index
    %1 = vector.load %arg1[%c0_1, %c0_2] : memref<64x256xbf16, #tpu.memory_space<vmem>>, vector<64x256xbf16>
    %2 = arith.truncf %0 : vector<2x64xf32> to vector<2x64xbf16>
    %cst = arith.constant dense<0.000000e+00> : vector<2x256xf32>
    %3 = tpu.matmul %2, %1, %cst {dimension_numbers = #tpu.dot_dimension_numbers<[1], [0], [0], [1], [0, 0, 1, 1], [], []>} : vector<2x64xbf16>, vector<64x256xbf16>, vector<2x256xf32> -> vector<2x256xf32>
    %c0_3 = arith.constant 0 : index
    %c0_4 = arith.constant 0 : index
    %4 = vector.load %arg2[%c0_3, %c0_4] : memref<1x256xf32, #tpu.memory_space<vmem>>, vector<1x256xf32>
    %5 = vector.broadcast %4 : vector<1x256xf32> to vector<2x256xf32>
    %6 = arith.addf %3, %5 : vector<2x256xf32>
    %cst_5 = arith.constant 0.000000e+00 : f32
    %7 = vector.broadcast %cst_5 : f32 to vector<2x256xf32>
    %8 = arith.maximumf %6, %7 : vector<2x256xf32>
    %cst_6 = arith.constant dense<0.000000e+00> : vector<256xf32>
    %9 = vector.multi_reduction <add>, %8, %cst_6 [0] : vector<2x256xf32> to vector<256xf32>
    %10 = vector.shape_cast %9 : vector<256xf32> to vector<1x256xf32>
    %cst_7 = arith.constant 5.000000e-01 : f32
    %11 = vector.broadcast %cst_7 : f32 to vector<1x256xf32>
    %12 = arith.mulf %10, %11 : vector<1x256xf32>
    %13 = arith.mulf %8, %8 : vector<2x256xf32>
    %cst_8 = arith.constant dense<0.000000e+00> : vector<256xf32>
    %14 = vector.multi_reduction <add>, %13, %cst_8 [0] : vector<2x256xf32> to vector<256xf32>
    %15 = vector.shape_cast %14 : vector<256xf32> to vector<1x256xf32>
    %cst_9 = arith.constant 5.000000e-01 : f32
    %16 = vector.broadcast %cst_9 : f32 to vector<1x256xf32>
    %17 = arith.mulf %15, %16 : vector<1x256xf32>
    %18 = arith.mulf %12, %12 : vector<1x256xf32>
    %19 = arith.subf %17, %18 : vector<1x256xf32>
    %cst_10 = arith.constant 0.000000e+00 : f32
    %20 = vector.broadcast %cst_10 : f32 to vector<1x256xf32>
    %21 = arith.maximumf %19, %20 : vector<1x256xf32>
    %c0_11 = arith.constant 0 : index
    %c0_12 = arith.constant 0 : index
    %22 = vector.load %arg3[%c0_11, %c0_12] : memref<1x256xf32, #tpu.memory_space<vmem>>, vector<1x256xf32>
    %cst_13 = arith.constant 9.99999974E-6 : f32
    %23 = vector.broadcast %cst_13 : f32 to vector<1x256xf32>
    %24 = arith.addf %21, %23 : vector<1x256xf32>
    %25 = math.rsqrt %24 : vector<1x256xf32>
    %26 = arith.mulf %22, %25 : vector<1x256xf32>
    %c0_14 = arith.constant 0 : index
    %c0_15 = arith.constant 0 : index
    %27 = vector.load %arg4[%c0_14, %c0_15] : memref<1x256xf32, #tpu.memory_space<vmem>>, vector<1x256xf32>
    %28 = arith.mulf %12, %26 : vector<1x256xf32>
    %29 = arith.subf %27, %28 : vector<1x256xf32>
    %c0_16 = arith.constant 0 : index
    %c0_17 = arith.constant 0 : index
    %30 = vector.load %arg5[%c0_16, %c0_17] : memref<256x128xbf16, #tpu.memory_space<vmem>>, vector<256x128xbf16>
    %31 = tpu.iota {dimensions = array<i32: 0>} : vector<256x256xi32>
    %32 = tpu.iota {dimensions = array<i32: 1>} : vector<256x256xi32>
    %33 = arith.cmpi eq, %31, %32 : vector<256x256xi32>
    %34 = vector.shape_cast %26 : vector<1x256xf32> to vector<1x256xf32>
    %35 = vector.broadcast %34 : vector<1x256xf32> to vector<256x256xf32>
    %cst_18 = arith.constant 0.000000e+00 : f32
    %36 = vector.broadcast %cst_18 : f32 to vector<256x256xf32>
    %37 = arith.select %33, %35, %36 : vector<256x256xi1>, vector<256x256xf32>
    %38 = arith.truncf %37 : vector<256x256xf32> to vector<256x256xbf16>
    %cst_19 = arith.constant dense<0.000000e+00> : vector<256x128xf32>
    %39 = tpu.matmul %38, %30, %cst_19 {dimension_numbers = #tpu.dot_dimension_numbers<[1], [0], [0], [1], [0, 0, 1, 1], [], []>} : vector<256x256xbf16>, vector<256x128xbf16>, vector<256x128xf32> -> vector<256x128xf32>
    %40 = arith.truncf %39 : vector<256x128xf32> to vector<256x128xbf16>
    %c0_20 = arith.constant 0 : index
    %c0_21 = arith.constant 0 : index
    %41 = vector.load %arg6[%c0_20, %c0_21] : memref<1x128xf32, #tpu.memory_space<vmem>>, vector<1x128xf32>
    %42 = arith.truncf %29 : vector<1x256xf32> to vector<1x256xbf16>
    %c0_22 = arith.constant 0 : index
    %c0_23 = arith.constant 0 : index
    %43 = vector.load %arg5[%c0_22, %c0_23] : memref<256x128xbf16, #tpu.memory_space<vmem>>, vector<256x128xbf16>
    %cst_24 = arith.constant dense<0.000000e+00> : vector<1x128xf32>
    %44 = tpu.matmul %42, %43, %cst_24 {dimension_numbers = #tpu.dot_dimension_numbers<[1], [0], [0], [1], [0, 0, 1, 1], [], []>} : vector<1x256xbf16>, vector<256x128xbf16>, vector<1x128xf32> -> vector<1x128xf32>
    %45 = arith.addf %41, %44 : vector<1x128xf32>
    %46 = arith.truncf %8 : vector<2x256xf32> to vector<2x256xbf16>
    %cst_25 = arith.constant dense<0.000000e+00> : vector<2x128xf32>
    %47 = tpu.matmul %46, %40, %cst_25 {dimension_numbers = #tpu.dot_dimension_numbers<[1], [0], [0], [1], [0, 0, 1, 1], [], []>} : vector<2x256xbf16>, vector<256x128xbf16>, vector<2x128xf32> -> vector<2x128xf32>
    %48 = vector.broadcast %45 : vector<1x128xf32> to vector<2x128xf32>
    %49 = arith.addf %47, %48 : vector<2x128xf32>
    %cst_26 = arith.constant 0.000000e+00 : f32
    %50 = vector.broadcast %cst_26 : f32 to vector<2x128xf32>
    %51 = arith.maximumf %49, %50 : vector<2x128xf32>
    %cst_27 = arith.constant dense<0.000000e+00> : vector<128xf32>
    %52 = vector.multi_reduction <add>, %51, %cst_27 [0] : vector<2x128xf32> to vector<128xf32>
    %53 = vector.shape_cast %52 : vector<128xf32> to vector<1x128xf32>
    %cst_28 = arith.constant 5.000000e-01 : f32
    %54 = vector.broadcast %cst_28 : f32 to vector<1x128xf32>
    %55 = arith.mulf %53, %54 : vector<1x128xf32>
    %56 = arith.mulf %51, %51 : vector<2x128xf32>
    %cst_29 = arith.constant dense<0.000000e+00> : vector<128xf32>
    %57 = vector.multi_reduction <add>, %56, %cst_29 [0] : vector<2x128xf32> to vector<128xf32>
    %58 = vector.shape_cast %57 : vector<128xf32> to vector<1x128xf32>
    %cst_30 = arith.constant 5.000000e-01 : f32
    %59 = vector.broadcast %cst_30 : f32 to vector<1x128xf32>
    %60 = arith.mulf %58, %59 : vector<1x128xf32>
    %61 = arith.mulf %55, %55 : vector<1x128xf32>
    %62 = arith.subf %60, %61 : vector<1x128xf32>
    %cst_31 = arith.constant 0.000000e+00 : f32
    %63 = vector.broadcast %cst_31 : f32 to vector<1x128xf32>
    %64 = arith.maximumf %62, %63 : vector<1x128xf32>
    %c0_32 = arith.constant 0 : index
    %c0_33 = arith.constant 0 : index
    %65 = vector.load %arg7[%c0_32, %c0_33] : memref<1x128xf32, #tpu.memory_space<vmem>>, vector<1x128xf32>
    %cst_34 = arith.constant 9.99999974E-6 : f32
    %66 = vector.broadcast %cst_34 : f32 to vector<1x128xf32>
    %67 = arith.addf %64, %66 : vector<1x128xf32>
    %68 = math.rsqrt %67 : vector<1x128xf32>
    %69 = arith.mulf %65, %68 : vector<1x128xf32>
    %c0_35 = arith.constant 0 : index
    %c0_36 = arith.constant 0 : index
    %70 = vector.load %arg8[%c0_35, %c0_36] : memref<1x128xf32, #tpu.memory_space<vmem>>, vector<1x128xf32>
    %71 = arith.mulf %55, %69 : vector<1x128xf32>
    %72 = arith.subf %70, %71 : vector<1x128xf32>
    %c0_37 = arith.constant 0 : index
    %c0_38 = arith.constant 0 : index
    %73 = vector.load %arg9[%c0_37, %c0_38] : memref<128x32xbf16, #tpu.memory_space<vmem>>, vector<128x32xbf16>
    %74 = tpu.iota {dimensions = array<i32: 0>} : vector<128x128xi32>
    %75 = tpu.iota {dimensions = array<i32: 1>} : vector<128x128xi32>
    %76 = arith.cmpi eq, %74, %75 : vector<128x128xi32>
    %77 = vector.shape_cast %69 : vector<1x128xf32> to vector<1x128xf32>
    %78 = vector.broadcast %77 : vector<1x128xf32> to vector<128x128xf32>
    %cst_39 = arith.constant 0.000000e+00 : f32
    %79 = vector.broadcast %cst_39 : f32 to vector<128x128xf32>
    %80 = arith.select %76, %78, %79 : vector<128x128xi1>, vector<128x128xf32>
    %81 = arith.truncf %80 : vector<128x128xf32> to vector<128x128xbf16>
    %cst_40 = arith.constant dense<0.000000e+00> : vector<128x32xf32>
    %82 = tpu.matmul %81, %73, %cst_40 {dimension_numbers = #tpu.dot_dimension_numbers<[1], [0], [0], [1], [0, 0, 1, 1], [], []>} : vector<128x128xbf16>, vector<128x32xbf16>, vector<128x32xf32> -> vector<128x32xf32>
    %83 = arith.truncf %82 : vector<128x32xf32> to vector<128x32xbf16>
    %c0_41 = arith.constant 0 : index
    %c0_42 = arith.constant 0 : index
    %84 = vector.load %arg10[%c0_41, %c0_42] : memref<1x32xf32, #tpu.memory_space<vmem>>, vector<1x32xf32>
    %85 = arith.truncf %72 : vector<1x128xf32> to vector<1x128xbf16>
    %c0_43 = arith.constant 0 : index
    %c0_44 = arith.constant 0 : index
    %86 = vector.load %arg9[%c0_43, %c0_44] : memref<128x32xbf16, #tpu.memory_space<vmem>>, vector<128x32xbf16>
    %cst_45 = arith.constant dense<0.000000e+00> : vector<1x32xf32>
    %87 = tpu.matmul %85, %86, %cst_45 {dimension_numbers = #tpu.dot_dimension_numbers<[1], [0], [0], [1], [0, 0, 1, 1], [], []>} : vector<1x128xbf16>, vector<128x32xbf16>, vector<1x32xf32> -> vector<1x32xf32>
    %88 = arith.addf %84, %87 : vector<1x32xf32>
    %89 = arith.truncf %51 : vector<2x128xf32> to vector<2x128xbf16>
    %cst_46 = arith.constant dense<0.000000e+00> : vector<2x32xf32>
    %90 = tpu.matmul %89, %83, %cst_46 {dimension_numbers = #tpu.dot_dimension_numbers<[1], [0], [0], [1], [0, 0, 1, 1], [], []>} : vector<2x128xbf16>, vector<128x32xbf16>, vector<2x32xf32> -> vector<2x32xf32>
    %91 = vector.broadcast %88 : vector<1x32xf32> to vector<2x32xf32>
    %92 = arith.addf %90, %91 : vector<2x32xf32>
    %c0_47 = arith.constant 0 : index
    %c0_48 = arith.constant 0 : index
    %93 = vector.load %arg11[%c0_47, %c0_48] : memref<2x32xf32, #tpu.memory_space<vmem>>, vector<2x32xf32>
    tpu.vector_store %arg11[%c0_47, %c0_48], %92 {strides = array<i32>} : memref<2x32xf32, #tpu.memory_space<vmem>>, vector<2x32xf32>,
    return
  }
}

</mosaic_0001>

<llo_original>
// kernel: state_dimensionality_reducer.1
$region0: #{state_dimensionality_reducer.1}
  #allocation0 [shape = 'u32[]', space=smem, size = 0x4, offset = 0x4, fixed_abs, tag = 'smem constant byte address 0x4 - core index']
  #allocation1 [shape = 'u32[144,128]{1,0:T(1,128)}', space=vmem, size = 0x12000, scoped, tag = 'internal scratch']
  %s0 = inlined_call_operand.vmem [shape: f32[2,1024], index: 0, kind: input, shape index: {}]
  %s1 = inlined_call_operand.vmem [shape: bf16[64,256], index: 1, kind: input, shape index: {}]
  %s2 = inlined_call_operand.vmem [shape: f32[1,256], index: 2, kind: input, shape index: {}]
  %s3 = inlined_call_operand.vmem [shape: f32[1,256], index: 3, kind: input, shape index: {}]
  %s4 = inlined_call_operand.vmem [shape: f32[1,256], index: 4, kind: input, shape index: {}]
  %s5 = inlined_call_operand.vmem [shape: bf16[256,128], index: 5, kind: input, shape index: {}]
  %s6 = inlined_call_operand.vmem [shape: f32[1,128], index: 6, kind: input, shape index: {}]
  %s7 = inlined_call_operand.vmem [shape: f32[1,128], index: 7, kind: input, shape index: {}]
  %s8 = inlined_call_operand.vmem [shape: f32[1,128], index: 8, kind: input, shape index: {}]
  %s9 = inlined_call_operand.vmem [shape: bf16[128,32], index: 9, kind: input, shape index: {}]
  %s10 = inlined_call_operand.vmem [shape: f32[1,32], index: 10, kind: input, shape index: {}]
  %s11 = inlined_call_operand.hbm [shape: f32[2,32], index: 11, kind: output, shape index: {}]
  %s12 = sld [smem:[#allocation0]]
  $region54: #{state_dimensionality_reducer.1} parent=0
    _
  %s14 = ssub.s32 1, %s12
  %s15 = scalar_select 0, %s14, %s12
  $region1: #{state_dimensionality_reducer.1} parent=0
    #allocation2 [shape = 'u8[1024]{0}', space=vmem, size = 0x400, scoped, tag = 'output window, operand 0, single buffered']
    #allocation3 [shape = 's32[1]{0}', space=sflag, size = 0x4, scoped, tag = 'scoped memory for state_dimensionality_reducer.1']
    %16 = vsyncpa [#allocation3], 0
    // Predicated region
    $region2: #{state_dimensionality_reducer.1} parent=1 // pred_check
      _
    $region3: #{state_dimensionality_reducer.1} parent=1 // pred_check_branch
      %18 = sbr.rel (0) target = $region5
    $region4: #{state_dimensionality_reducer.1} parent=1 // pred_region
      _
    $region5: #{state_dimensionality_reducer.1} parent=1 // pred_fallthru
      _
    // Predicated region
    $region6: #{state_dimensionality_reducer.1} parent=1 // pred_check
      _
    $region7: #{state_dimensionality_reducer.1} parent=1 // pred_check_branch
      %20 = sbr.rel (0) target = $region9
    $region8: #{state_dimensionality_reducer.1} parent=1 // pred_region
      _
    $region9: #{state_dimensionality_reducer.1} parent=1 // pred_fallthru
      _
    // Predicated region
    $region10: #{state_dimensionality_reducer.1} parent=1 // pred_check
      _
    $region11: #{state_dimensionality_reducer.1} parent=1 // pred_check_branch
      %22 = sbr.rel (0) target = $region13
    $region12: #{state_dimensionality_reducer.1} parent=1 // pred_region
      _
    $region13: #{state_dimensionality_reducer.1} parent=1 // pred_fallthru
      _
    // Predicated region
    $region14: #{state_dimensionality_reducer.1} parent=1 // pred_check
      _
    $region15: #{state_dimensionality_reducer.1} parent=1 // pred_check_branch
      %24 = sbr.rel (0) target = $region17
    $region16: #{state_dimensionality_reducer.1} parent=1 // pred_region
      _
    $region17: #{state_dimensionality_reducer.1} parent=1 // pred_fallthru
      _
    // Predicated region
    $region18: #{state_dimensionality_reducer.1} parent=1 // pred_check
      _
    $region19: #{state_dimensionality_reducer.1} parent=1 // pred_check_branch
      %26 = sbr.rel (0) target = $region21
    $region20: #{state_dimensionality_reducer.1} parent=1 // pred_region
      _
    $region21: #{state_dimensionality_reducer.1} parent=1 // pred_fallthru
      _
    // Predicated region
    $region22: #{state_dimensionality_reducer.1} parent=1 // pred_check
      _
    $region23: #{state_dimensionality_reducer.1} parent=1 // pred_check_branch
      %28 = sbr.rel (0) target = $region25
    $region24: #{state_dimensionality_reducer.1} parent=1 // pred_region
      _
    $region25: #{state_dimensionality_reducer.1} parent=1 // pred_fallthru
      _
    // Predicated region
    $region26: #{state_dimensionality_reducer.1} parent=1 // pred_check
      _
    $region27: #{state_dimensionality_reducer.1} parent=1 // pred_check_branch
      %30 = sbr.rel (0) target = $region29
    $region28: #{state_dimensionality_reducer.1} parent=1 // pred_region
      _
    $region29: #{state_dimensionality_reducer.1} parent=1 // pred_fallthru
      _
    // Predicated region
    $region30: #{state_dimensionality_reducer.1} parent=1 // pred_check
      _
    $region31: #{state_dimensionality_reducer.1} parent=1 // pred_check_branch
      %32 = sbr.rel (0) target = $region33
    $region32: #{state_dimensionality_reducer.1} parent=1 // pred_region
      _
    $region33: #{state_dimensionality_reducer.1} parent=1 // pred_fallthru
      _
    // Predicated region
    $region34: #{state_dimensionality_reducer.1} parent=1 // pred_check
      _
    $region35: #{state_dimensionality_reducer.1} parent=1 // pred_check_branch
      %34 = sbr.rel (0) target = $region37
    $region36: #{state_dimensionality_reducer.1} parent=1 // pred_region
      _
    $region37: #{state_dimensionality_reducer.1} parent=1 // pred_fallthru
      _
    // Predicated region
    $region38: #{state_dimensionality_reducer.1} parent=1 // pred_check
      _
    $region39: #{state_dimensionality_reducer.1} parent=1 // pred_check_branch
      %36 = sbr.rel (0) target = $region41
    $region40: #{state_dimensionality_reducer.1} parent=1 // pred_region
      _
    $region41: #{state_dimensionality_reducer.1} parent=1 // pred_fallthru
      _
    // Predicated region
    $region42: #{state_dimensionality_reducer.1} parent=1 // pred_check
      _
    $region43: #{state_dimensionality_reducer.1} parent=1 // pred_check_branch
      %38 = sbr.rel (0) target = $region45
    $region44: #{state_dimensionality_reducer.1} parent=1 // pred_region
      _
    $region45: #{state_dimensionality_reducer.1} parent=1 // pred_fallthru
      _
    %v40 = vld [vmem:[%s0] sm:$0x3]
    %v41 = vld [vmem:[%s1] sm:$0xff]
    %v42 = vld [vmem:[%s1 + $0x8] sm:$0xff]
    %v43 = vld [vmem:[%s1 + $0x10] sm:$0xff]
    %v44 = vld [vmem:[%s1 + $0x18] sm:$0xff]
    %v45 = vld [vmem:[%s1 + $0x20] sm:$0xff]
    %v46 = vld [vmem:[%s1 + $0x28] sm:$0xff]
    %v47 = vld [vmem:[%s1 + $0x30] sm:$0xff]
    %v48 = vld [vmem:[%s1 + $0x38] sm:$0xff]
    %v49 = vpack.c.bf16 %v40, %v40
    %v50 = vld [vmem:[%s2] sm:$0x3]
    %v52 = vlaneseq
    %v53 = vshrl.u32 %v52, 7
    %v54 = vsub.s32 0, %v53
    %v55 = vrot.slane %v50, %v54
    %v56 = vlaneseq
    %v57 = vshrl.u32 %v56, 7
    %v58 = vsub.s32 1, %v57
    %v59 = vrot.slane %v50, %v58
    %v70 = vunpack.c.l.b16 %v41
    %v71 = vunpack.c.h.b16 %v41
    %v72 = vunpack.c.l.b16 %v42
    %v73 = vunpack.c.h.b16 %v42
    %v74 = vunpack.c.l.b16 %v43
    %v75 = vunpack.c.h.b16 %v43
    %v76 = vunpack.c.l.b16 %v44
    %v77 = vunpack.c.h.b16 %v44
    %v78 = vunpack.c.l.b16 %v45
    %v79 = vunpack.c.h.b16 %v45
    %v80 = vunpack.c.l.b16 %v46
    %v81 = vunpack.c.h.b16 %v46
    %v82 = vunpack.c.l.b16 %v47
    %v83 = vunpack.c.h.b16 %v47
    %v84 = vunpack.c.l.b16 %v48
    %v85 = vunpack.c.h.b16 %v48
    %v86 = vpack.c.b16 %v72, %v70
    %v87 = vpack.c.b16 %v73, %v71
    %v88 = vpack.c.b16 %v76, %v74
    %v89 = vpack.c.b16 %v77, %v75
    %v90 = vpack.c.b16 %v80, %v78
    %v91 = vpack.c.b16 %v81, %v79
    %v92 = vpack.c.b16 %v84, %v82
    %v93 = vpack.c.b16 %v85, %v83
    %vm102 = vcmask 523264
    %v104 = vsel %vm102, %v49, 0
    %106 = vmatprep.subr.bf16.mxu0 0
    %107 = vmatpush1.bf16.msra.mxu0 0
    %108 = vmatprep.subr.bf16.mxu0 0
    %109 = vmatpush1.bf16.msra.mxu0 0
    %110 = vmatprep.subr.bf16.mxu0 0
    %111 = vmatpush1.bf16.msra.mxu0 0
    %112 = vmatprep.subr.bf16.mxu0 0
    %113 = vmatpush1.bf16.msra.mxu0 0
    %114 = vmatprep.subr.bf16.mxu0 %v93
    %115 = vmatpush1.bf16.msra.mxu0 %v92
    %116 = vmatprep.subr.bf16.mxu0 %v91
    %117 = vmatpush1.bf16.msra.mxu0 %v90
    %118 = vmatprep.subr.bf16.mxu0 %v89
    %119 = vmatpush1.bf16.msra.mxu0 %v88
    %120 = vmatprep.subr.bf16.mxu0 %v87
    %121 = vmatpush1.bf16.msra.mxu0 %v86
    %122 = vmatprep.subr.bf16.mxu0 0
    %123 = vmatpush2.bf16.msra.mxu0 0
    %124 = vmatprep.subr.bf16.mxu0 0
    %125 = vmatpush2.bf16.msra.mxu0 0
    %126 = vmatprep.subr.bf16.mxu0 0
    %127 = vmatpush2.bf16.msra.mxu0 0
    %128 = vmatprep.subr.bf16.mxu0 0
    %129 = vmatpush2.bf16.msra.mxu0 0
    %130 = vmatprep.subr.bf16.mxu0 0
    %131 = vmatpush2.bf16.msra.mxu0 0
    %132 = vmatprep.subr.bf16.mxu0 0
    %133 = vmatpush2.bf16.msra.mxu0 0
    %134 = vmatprep.subr.bf16.mxu0 0
    %135 = vmatpush2.bf16.msra.mxu0 0
    %136 = vmatprep.subr.bf16.mxu0 0
    %137 = vmatpush2.bf16.msra.mxu0 0
    %138 = vmatprep.mubr.bf16.mxu0 0
    %139 = vmatmul.mubr.bf16.gmra.mxu0 %v104
    %v140 = vpop.f32.mrf.mxu0
    %v141 = vadd.f32 %v55, %v140
    %v142 = vpop.f32.mrf.mxu0
    %v143 = vadd.f32 %v59, %v142
    %v144 = vpop.f32.mrf.mxu0
    %v145 = vpop.f32.mrf.mxu0
    %146 = vdwg.mxu0
    %v147 = vmax.f32 %v141, 0.0
    %v148 = vmax.f32 %v143, 0.0
    %vm149 = vcmask 1041408
    %v150 = vsel %vm149, %v147, 0.0
    %v151 = vrot.slane %v150, 4
    %v152 = vadd.f32 %v150, %v151
    %v153 = vrot.slane %v152, 2
    %v154 = vadd.f32 %v152, %v153
    %v155 = vrot.slane %v154, 1
    %v156 = vadd.f32 %v154, %v155
    %v157 = vsel %vm149, %v148, 0.0
    %v158 = vrot.slane %v157, 4
    %v159 = vadd.f32 %v157, %v158
    %v160 = vrot.slane %v159, 2
    %v161 = vadd.f32 %v159, %v160
    %v162 = vrot.slane %v161, 1
    %v163 = vadd.f32 %v161, %v162
    %v164 = vmul.f32 %v156, 0.5
    %v165 = vmul.f32 %v163, 0.5
    %v166 = vmul.f32 %v147, %v147
    %v167 = vmul.f32 %v148, %v148
    %v168 = vsel %vm149, %v166, 0.0
    %v169 = vrot.slane %v168, 4
    %v170 = vadd.f32 %v168, %v169
    %v171 = vrot.slane %v170, 2
    %v172 = vadd.f32 %v170, %v171
    %v173 = vrot.slane %v172, 1
    %v174 = vadd.f32 %v172, %v173
    %v175 = vsel %vm149, %v167, 0.0
    %v176 = vrot.slane %v175, 4
    %v177 = vadd.f32 %v175, %v176
    %v178 = vrot.slane %v177, 2
    %v179 = vadd.f32 %v177, %v178
    %v180 = vrot.slane %v179, 1
    %v181 = vadd.f32 %v179, %v180
    %v182 = vmul.f32 %v174, 0.5
    %v183 = vmul.f32 %v181, 0.5
    %v184 = vmul.f32 %v164, %v164
    %v185 = vmul.f32 %v165, %v165
    %v186 = vsub.f32 %v182, %v184
    %v187 = vsub.f32 %v183, %v185
    %v188 = vmax.f32 %v186, 0.0
    %v189 = vmax.f32 %v187, 0.0
    %v190 = vld [vmem:[%s3] sm:$0x3]
    %v191 = vadd.f32 %v188, 1e-05
    %v192 = vadd.f32 %v189, 1e-05
    %v193 = vrsqrt.pop %v191
    %v194 = vrsqrt.pop %v192
    %v197 = vcombine.low %v193, %v194
    %v199 = vunpack.c.l.s4 1966171168
    %v200 = vunpack.c.0.s8 %v199
    %v201 = vlaneseq
    %v202 = vshrl.u32 %v201, 7
    %v203 = vsub.s32 %v200, %v202
    %v204 = vrot.slane %v197, %v203
    %v206 = vunpack.c.l.s4 1966171168
    %v207 = vunpack.c.0.s8 %v206
    %v208 = vlaneseq
    %v209 = vshrl.u32 %v208, 7
    %v210 = vsub.s32 %v207, %v209
    %v211 = vrot.slane %v204, %v210
    %v213 = vmul.f32 %v190, %v211
    %v214 = vld [vmem:[%s4] sm:$0x3]
    %v216 = vlaneseq
    %v217 = vshrl.u32 %v216, 7
    %v218 = vsub.s32 0, %v217
    %v219 = vrot.slane %v213, %v218
    %v220 = vlaneseq
    %v221 = vshrl.u32 %v220, 7
    %v222 = vsub.s32 1, %v221
    %v223 = vrot.slane %v213, %v222
    %v226 = vmul.f32 %v164, %v219
    %v227 = vmul.f32 %v165, %v223
    %v230 = vcombine.low %v226, %v227
    %v232 = vunpack.c.l.s4 1966171168
    %v233 = vunpack.c.0.s8 %v232
    %v234 = vlaneseq
    %v235 = vshrl.u32 %v234, 7
    %v236 = vsub.s32 %v233, %v235
    %v237 = vrot.slane %v230, %v236
    %v239 = vunpack.c.l.s4 1966171168
    %v240 = vunpack.c.0.s8 %v239
    %v241 = vlaneseq
    %v242 = vshrl.u32 %v241, 7
    %v243 = vsub.s32 %v240, %v242
    %v244 = vrot.slane %v237, %v243
    %v246 = vsub.f32 %v214, %v244
    %v247 = vld [vmem:[%s5] sm:$0xf]
    %v248 = vld [vmem:[%s5 + $0x4] sm:$0xf]
    %v249 = vld [vmem:[%s5 + $0x8] sm:$0xf]
    %v250 = vld [vmem:[%s5 + $0xc] sm:$0xf]
    %v251 = vld [vmem:[%s5 + $0x10] sm:$0xf]
    %v252 = vld [vmem:[%s5 + $0x14] sm:$0xf]
    %v253 = vld [vmem:[%s5 + $0x18] sm:$0xf]
    %v254 = vld [vmem:[%s5 + $0x1c] sm:$0xf]
    %v255 = vld [vmem:[%s5 + $0x20] sm:$0xf]
    %v256 = vld [vmem:[%s5 + $0x24] sm:$0xf]
    %v257 = vld [vmem:[%s5 + $0x28] sm:$0xf]
    %v258 = vld [vmem:[%s5 + $0x2c] sm:$0xf]
    %v259 = vld [vmem:[%s5 + $0x30] sm:$0xf]
    %v260 = vld [vmem:[%s5 + $0x34] sm:$0xf]
    %v261 = vld [vmem:[%s5 + $0x38] sm:$0xf]
    %v262 = vld [vmem:[%s5 + $0x3c] sm:$0xf]
    %v263 = vld [vmem:[%s5 + $0x40] sm:$0xf]
    %v264 = vld [vmem:[%s5 + $0x44] sm:$0xf]
    %v265 = vld [vmem:[%s5 + $0x48] sm:$0xf]
    %v266 = vld [vmem:[%s5 + $0x4c] sm:$0xf]
    %v267 = vld [vmem:[%s5 + $0x50] sm:$0xf]
    %v268 = vld [vmem:[%s5 + $0x54] sm:$0xf]
    %v269 = vld [vmem:[%s5 + $0x58] sm:$0xf]
    %v270 = vld [vmem:[%s5 + $0x5c] sm:$0xf]
    %v271 = vld [vmem:[%s5 + $0x60] sm:$0xf]
    %v272 = vld [vmem:[%s5 + $0x64] sm:$0xf]
    %v273 = vld [vmem:[%s5 + $0x68] sm:$0xf]
    %v274 = vld [vmem:[%s5 + $0x6c] sm:$0xf]
    %v275 = vld [vmem:[%s5 + $0x70] sm:$0xf]
    %v276 = vld [vmem:[%s5 + $0x74] sm:$0xf]
    %v277 = vld [vmem:[%s5 + $0x78] sm:$0xf]
    %v278 = vld [vmem:[%s5 + $0x7c] sm:$0xf]
    %v279 = vlaneseq
    %v280 = vshrl.u32 %v279, 7
    %v281 = vadd.s32 %v280, 8
    %v282 = vadd.s32 %v280, 16
    %v283 = vadd.s32 %v280, 24
    %v284 = vadd.s32 %v280, 32
    %v285 = vadd.s32 %v280, 40
    %v286 = vadd.s32 %v280, 48
    %v287 = vadd.s32 %v280, 56
    %v288 = vadd.s32 %v280, 64
    %v289 = vadd.s32 %v280, 72
    %v290 = vadd.s32 %v280, 80
    %v291 = vadd.s32 %v280, 88
    %v292 = vadd.s32 %v280, 96
    %v293 = vadd.s32 %v280, 104
    %v294 = vadd.s32 %v280, 112
    %v295 = vadd.s32 %v280, 120
    %v296 = vadd.s32 %v280, 128
    %v297 = vadd.s32 %v280, 136
    %v298 = vadd.s32 %v280, 144
    %v299 = vadd.s32 %v280, 152
    %v300 = vadd.s32 %v280, 160
    %v301 = vadd.s32 %v280, 168
    %v302 = vadd.s32 %v280, 176
    %v303 = vadd.s32 %v280, 184
    %v304 = vadd.s32 %v280, 192
    %v305 = vadd.s32 %v280, 200
    %v306 = vadd.s32 %v280, 208
    %v307 = vadd.s32 %v280, 216
    %v308 = vadd.s32 %v280, 224
    %v309 = vadd.s32 %v280, 232
    %v310 = vadd.s32 %v280, 240
    %v311 = vadd.s32 %v280, 248
    %v312 = vlaneseq
    %v313 = vand.u32 %v312, 127
    %v314 = vadd.s32 %v313, 128
    %vm315 = vcmp.eq.s32.totalorder %v280, %v313
    %vm316 = vcmp.eq.s32.totalorder %v280, %v314
    %vm317 = vcmp.eq.s32.totalorder %v281, %v313
    %vm318 = vcmp.eq.s32.totalorder %v281, %v314
    %vm319 = vcmp.eq.s32.totalorder %v282, %v313
    %vm320 = vcmp.eq.s32.totalorder %v282, %v314
    %vm321 = vcmp.eq.s32.totalorder %v283, %v313
    %vm322 = vcmp.eq.s32.totalorder %v283, %v314
    %vm323 = vcmp.eq.s32.totalorder %v284, %v313
    %vm324 = vcmp.eq.s32.totalorder %v284, %v314
    %vm325 = vcmp.eq.s32.totalorder %v285, %v313
    %vm326 = vcmp.eq.s32.totalorder %v285, %v314
    %vm327 = vcmp.eq.s32.totalorder %v286, %v313
    %vm328 = vcmp.eq.s32.totalorder %v286, %v314
    %vm329 = vcmp.eq.s32.totalorder %v287, %v313
    %vm330 = vcmp.eq.s32.totalorder %v287, %v314
    %vm331 = vcmp.eq.s32.totalorder %v288, %v313
    %vm332 = vcmp.eq.s32.totalorder %v288, %v314
    %vm333 = vcmp.eq.s32.totalorder %v289, %v313
    %vm334 = vcmp.eq.s32.totalorder %v289, %v314
    %vm335 = vcmp.eq.s32.totalorder %v290, %v313
    %vm336 = vcmp.eq.s32.totalorder %v290, %v314
    %vm337 = vcmp.eq.s32.totalorder %v291, %v313
    %vm338 = vcmp.eq.s32.totalorder %v291, %v314
    %vm339 = vcmp.eq.s32.totalorder %v292, %v313
    %vm340 = vcmp.eq.s32.totalorder %v292, %v314
    %vm341 = vcmp.eq.s32.totalorder %v293, %v313
    %vm342 = vcmp.eq.s32.totalorder %v293, %v314
    %vm343 = vcmp.eq.s32.totalorder %v294, %v313
    %vm344 = vcmp.eq.s32.totalorder %v294, %v314
    %vm345 = vcmp.eq.s32.totalorder %v295, %v313
    %vm346 = vcmp.eq.s32.totalorder %v295, %v314
    %vm347 = vcmp.eq.s32.totalorder %v296, %v313
    %vm348 = vcmp.eq.s32.totalorder %v296, %v314
    %vm349 = vcmp.eq.s32.totalorder %v297, %v313
    %vm350 = vcmp.eq.s32.totalorder %v297, %v314
    %vm351 = vcmp.eq.s32.totalorder %v298, %v313
    %vm352 = vcmp.eq.s32.totalorder %v298, %v314
    %vm353 = vcmp.eq.s32.totalorder %v299, %v313
    %vm354 = vcmp.eq.s32.totalorder %v299, %v314
    %vm355 = vcmp.eq.s32.totalorder %v300, %v313
    %vm356 = vcmp.eq.s32.totalorder %v300, %v314
    %vm357 = vcmp.eq.s32.totalorder %v301, %v313
    %vm358 = vcmp.eq.s32.totalorder %v301, %v314
    %vm359 = vcmp.eq.s32.totalorder %v302, %v313
    %vm360 = vcmp.eq.s32.totalorder %v302, %v314
    %vm361 = vcmp.eq.s32.totalorder %v303, %v313
    %vm362 = vcmp.eq.s32.totalorder %v303, %v314
    %vm363 = vcmp.eq.s32.totalorder %v304, %v313
    %vm364 = vcmp.eq.s32.totalorder %v304, %v314
    %vm365 = vcmp.eq.s32.totalorder %v305, %v313
    %vm366 = vcmp.eq.s32.totalorder %v305, %v314
    %vm367 = vcmp.eq.s32.totalorder %v306, %v313
    %vm368 = vcmp.eq.s32.totalorder %v306, %v314
    %vm369 = vcmp.eq.s32.totalorder %v307, %v313
    %vm370 = vcmp.eq.s32.totalorder %v307, %v314
    %vm371 = vcmp.eq.s32.totalorder %v308, %v313
    %vm372 = vcmp.eq.s32.totalorder %v308, %v314
    %vm373 = vcmp.eq.s32.totalorder %v309, %v313
    %vm374 = vcmp.eq.s32.totalorder %v309, %v314
    %vm375 = vcmp.eq.s32.totalorder %v310, %v313
    %vm376 = vcmp.eq.s32.totalorder %v310, %v314
    %vm377 = vcmp.eq.s32.totalorder %v311, %v313
    %vm378 = vcmp.eq.s32.totalorder %v311, %v314
    %v379 = vsel %vm315, %v219, 0.0
    %v380 = vsel %vm316, %v223, 0.0
    %v381 = vsel %vm317, %v219, 0.0
    %v382 = vsel %vm318, %v223, 0.0
    %v383 = vsel %vm319, %v219, 0.0
    %v384 = vsel %vm320, %v223, 0.0
    %v385 = vsel %vm321, %v219, 0.0
    %v386 = vsel %vm322, %v223, 0.0
    %v387 = vsel %vm323, %v219, 0.0
    %v388 = vsel %vm324, %v223, 0.0
    %v389 = vsel %vm325, %v219, 0.0
    %v390 = vsel %vm326, %v223, 0.0
    %v391 = vsel %vm327, %v219, 0.0
    %v392 = vsel %vm328, %v223, 0.0
    %v393 = vsel %vm329, %v219, 0.0
    %v394 = vsel %vm330, %v223, 0.0
    %v395 = vsel %vm331, %v219, 0.0
    %v396 = vsel %vm332, %v223, 0.0
    %v397 = vsel %vm333, %v219, 0.0
    %v398 = vsel %vm334, %v223, 0.0
    %v399 = vsel %vm335, %v219, 0.0
    %v400 = vsel %vm336, %v223, 0.0
    %v401 = vsel %vm337, %v219, 0.0
    %v402 = vsel %vm338, %v223, 0.0
    %v403 = vsel %vm339, %v219, 0.0
    %v404 = vsel %vm340, %v223, 0.0
    %v405 = vsel %vm341, %v219, 0.0
    %v406 = vsel %vm342, %v223, 0.0
    %v407 = vsel %vm343, %v219, 0.0
    %v408 = vsel %vm344, %v223, 0.0
    %v409 = vsel %vm345, %v219, 0.0
    %v410 = vsel %vm346, %v223, 0.0
    %v411 = vsel %vm347, %v219, 0.0
    %v412 = vsel %vm348, %v223, 0.0
    %v413 = vsel %vm349, %v219, 0.0
    %v414 = vsel %vm350, %v223, 0.0
    %v415 = vsel %vm351, %v219, 0.0
    %v416 = vsel %vm352, %v223, 0.0
    %v417 = vsel %vm353, %v219, 0.0
    %v418 = vsel %vm354, %v223, 0.0
    %v419 = vsel %vm355, %v219, 0.0
    %v420 = vsel %vm356, %v223, 0.0
    %v421 = vsel %vm357, %v219, 0.0
    %v422 = vsel %vm358, %v223, 0.0
    %v423 = vsel %vm359, %v219, 0.0
    %v424 = vsel %vm360, %v223, 0.0
    %v425 = vsel %vm361, %v219, 0.0
    %v426 = vsel %vm362, %v223, 0.0
    %v427 = vsel %vm363, %v219, 0.0
    %v428 = vsel %vm364, %v223, 0.0
    %v429 = vsel %vm365, %v219, 0.0
    %v430 = vsel %vm366, %v223, 0.0
    %v431 = vsel %vm367, %v219, 0.0
    %v432 = vsel %vm368, %v223, 0.0
    %v433 = vsel %vm369, %v219, 0.0
    %v434 = vsel %vm370, %v223, 0.0
    %v435 = vsel %vm371, %v219, 0.0
    %v436 = vsel %vm372, %v223, 0.0
    %v437 = vsel %vm373, %v219, 0.0
    %v438 = vsel %vm374, %v223, 0.0
    %v439 = vsel %vm375, %v219, 0.0
    %v440 = vsel %vm376, %v223, 0.0
    %v441 = vsel %vm377, %v219, 0.0
    %v442 = vsel %vm378, %v223, 0.0
    %v443 = vpack.c.bf16 %v381, %v379
    %v444 = vpack.c.bf16 %v382, %v380
    %v445 = vpack.c.bf16 %v385, %v383
    %v446 = vpack.c.bf16 %v386, %v384
    %v447 = vpack.c.bf16 %v389, %v387
    %v448 = vpack.c.bf16 %v390, %v388
    %v449 = vpack.c.bf16 %v393, %v391
    %v450 = vpack.c.bf16 %v394, %v392
    %v451 = vpack.c.bf16 %v397, %v395
    %v452 = vpack.c.bf16 %v398, %v396
    %v453 = vpack.c.bf16 %v401, %v399
    %v454 = vpack.c.bf16 %v402, %v400
    %v455 = vpack.c.bf16 %v405, %v403
    %v456 = vpack.c.bf16 %v406, %v404
    %v457 = vpack.c.bf16 %v409, %v407
    %v458 = vpack.c.bf16 %v410, %v408
    %v459 = vpack.c.bf16 %v413, %v411
    %v460 = vpack.c.bf16 %v414, %v412
    %v461 = vpack.c.bf16 %v417, %v415
    %v462 = vpack.c.bf16 %v418, %v416
    %v463 = vpack.c.bf16 %v421, %v419
    %v464 = vpack.c.bf16 %v422, %v420
    %v465 = vpack.c.bf16 %v425, %v423
    %v466 = vpack.c.bf16 %v426, %v424
    %v467 = vpack.c.bf16 %v429, %v427
    %v468 = vpack.c.bf16 %v430, %v428
    %v469 = vpack.c.bf16 %v433, %v431
    %v470 = vpack.c.bf16 %v434, %v432
    %v471 = vpack.c.bf16 %v437, %v435
    %v472 = vpack.c.bf16 %v438, %v436
    %v473 = vpack.c.bf16 %v441, %v439
    %v474 = vpack.c.bf16 %v442, %v440
    %v507 = vunpack.c.l.b16 %v247
    %v508 = vunpack.c.l.b16 %v248
    %v509 = vunpack.c.l.b16 %v249
    %v510 = vunpack.c.l.b16 %v250
    %v511 = vunpack.c.l.b16 %v251
    %v512 = vunpack.c.l.b16 %v252
    %v513 = vunpack.c.l.b16 %v253
    %v514 = vunpack.c.l.b16 %v254
    %v515 = vunpack.c.l.b16 %v255
    %v516 = vunpack.c.l.b16 %v256
    %v517 = vunpack.c.l.b16 %v257
    %v518 = vunpack.c.l.b16 %v258
    %v519 = vunpack.c.l.b16 %v259
    %v520 = vunpack.c.l.b16 %v260
    %v521 = vunpack.c.l.b16 %v261
    %v522 = vunpack.c.l.b16 %v262
    %v523 = vunpack.c.l.b16 %v263
    %v524 = vunpack.c.l.b16 %v264
    %v525 = vunpack.c.l.b16 %v265
    %v526 = vunpack.c.l.b16 %v266
    %v527 = vunpack.c.l.b16 %v267
    %v528 = vunpack.c.l.b16 %v268
    %v529 = vunpack.c.l.b16 %v269
    %v530 = vunpack.c.l.b16 %v270
    %v531 = vunpack.c.l.b16 %v271
    %v532 = vunpack.c.l.b16 %v272
    %v533 = vunpack.c.l.b16 %v273
    %v534 = vunpack.c.l.b16 %v274
    %v535 = vunpack.c.l.b16 %v275
    %v536 = vunpack.c.l.b16 %v276
    %v537 = vunpack.c.l.b16 %v277
    %v538 = vunpack.c.l.b16 %v278
    %v539 = vpack.c.b16 %v508, %v507
    %v540 = vpack.c.b16 %v510, %v509
    %v541 = vpack.c.b16 %v512, %v511
    %v542 = vpack.c.b16 %v514, %v513
    %v543 = vpack.c.b16 %v516, %v515
    %v544 = vpack.c.b16 %v518, %v517
    %v545 = vpack.c.b16 %v520, %v519
    %v546 = vpack.c.b16 %v522, %v521
    %v547 = vpack.c.b16 %v524, %v523
    %v548 = vpack.c.b16 %v526, %v525
    %v549 = vpack.c.b16 %v528, %v527
    %v550 = vpack.c.b16 %v530, %v529
    %v551 = vpack.c.b16 %v532, %v531
    %v552 = vpack.c.b16 %v534, %v533
    %v553 = vpack.c.b16 %v536, %v535
    %v554 = vpack.c.b16 %v538, %v537
    %571 = vmatprep.subr.bf16.mxu0 0
    %572 = vmatpush1.bf16.msra.mxu0 %v546
    %573 = vmatprep.subr.bf16.mxu0 0
    %574 = vmatpush1.bf16.msra.mxu0 %v545
    %575 = vmatprep.subr.bf16.mxu0 0
    %576 = vmatpush1.bf16.msra.mxu0 %v544
    %577 = vmatprep.subr.bf16.mxu0 0
    %578 = vmatpush1.bf16.msra.mxu0 %v543
    %579 = vmatprep.subr.bf16.mxu0 0
    %580 = vmatpush1.bf16.msra.mxu0 %v542
    %581 = vmatprep.subr.bf16.mxu0 0
    %582 = vmatpush1.bf16.msra.mxu0 %v541
    %583 = vmatprep.subr.bf16.mxu0 0
    %584 = vmatpush1.bf16.msra.mxu0 %v540
    %585 = vmatprep.subr.bf16.mxu0 0
    %586 = vmatpush1.bf16.msra.mxu0 %v539
    %587 = vmatprep.subr.bf16.mxu0 0
    %588 = vmatpush2.bf16.msra.mxu0 %v554
    %589 = vmatprep.subr.bf16.mxu0 0
    %590 = vmatpush2.bf16.msra.mxu0 %v553
    %591 = vmatprep.subr.bf16.mxu0 0
    %592 = vmatpush2.bf16.msra.mxu0 %v552
    %593 = vmatprep.subr.bf16.mxu0 0
    %594 = vmatpush2.bf16.msra.mxu0 %v551
    %595 = vmatprep.subr.bf16.mxu0 0
    %596 = vmatpush2.bf16.msra.mxu0 %v550
    %597 = vmatprep.subr.bf16.mxu0 0
    %598 = vmatpush2.bf16.msra.mxu0 %v549
    %599 = vmatprep.subr.bf16.mxu0 0
    %600 = vmatpush2.bf16.msra.mxu0 %v548
    %601 = vmatprep.subr.bf16.mxu0 0
    %602 = vmatpush2.bf16.msra.mxu0 %v547
    %603 = vmatprep.mubr.bf16.mxu0 %v444
    %604 = vmatmul.mubr.bf16.gmra.mxu0 %v443
    %v605 = vpop.f32.mrf.mxu0
    %v606 = vadd.f32 0.0, %v605
    %v607 = vpop.f32.mrf.mxu0
    %v608 = vpop.f32.mrf.mxu0
    %v609 = vadd.f32 0.0, %v608
    %v610 = vpop.f32.mrf.mxu0
    %611 = vmatprep.mubr.bf16.mxu0 %v446
    %612 = vmatmul.mubr.bf16.gmra.mxu0 %v445
    %v613 = vpop.f32.mrf.mxu0
    %v614 = vadd.f32 0.0, %v613
    %v615 = vpop.f32.mrf.mxu0
    %v616 = vpop.f32.mrf.mxu0
    %v617 = vadd.f32 0.0, %v616
    %v618 = vpop.f32.mrf.mxu0
    %619 = vmatprep.mubr.bf16.mxu0 %v448
    %620 = vmatmul.mubr.bf16.gmra.mxu0 %v447
    %v621 = vpop.f32.mrf.mxu0
    %v622 = vadd.f32 0.0, %v621
    %v623 = vpop.f32.mrf.mxu0
    %v624 = vpop.f32.mrf.mxu0
    %v625 = vadd.f32 0.0, %v624
    %v626 = vpop.f32.mrf.mxu0
    %627 = vmatprep.mubr.bf16.mxu0 %v450
    %628 = vmatmul.mubr.bf16.gmra.mxu0 %v449
    %v629 = vpop.f32.mrf.mxu0
    %v630 = vadd.f32 0.0, %v629
    %v631 = vpop.f32.mrf.mxu0
    %v632 = vpop.f32.mrf.mxu0
    %v633 = vadd.f32 0.0, %v632
    %v634 = vpop.f32.mrf.mxu0
    %635 = vmatprep.mubr.bf16.mxu0 %v452
    %636 = vmatmul.mubr.bf16.gmra.mxu0 %v451
    %v637 = vpop.f32.mrf.mxu0
    %v638 = vadd.f32 0.0, %v637
    %v639 = vpop.f32.mrf.mxu0
    %v640 = vpop.f32.mrf.mxu0
    %v641 = vadd.f32 0.0, %v640
    %v642 = vpop.f32.mrf.mxu0
    %643 = vmatprep.mubr.bf16.mxu0 %v454
    %644 = vmatmul.mubr.bf16.gmra.mxu0 %v453
    %v645 = vpop.f32.mrf.mxu0
    %v646 = vadd.f32 0.0, %v645
    %v647 = vpop.f32.mrf.mxu0
    %v648 = vpop.f32.mrf.mxu0
    %v649 = vadd.f32 0.0, %v648
    %v650 = vpop.f32.mrf.mxu0
    %651 = vmatprep.mubr.bf16.mxu0 %v456
    %652 = vmatmul.mubr.bf16.gmra.mxu0 %v455
    %v653 = vpop.f32.mrf.mxu0
    %v654 = vadd.f32 0.0, %v653
    %v655 = vpop.f32.mrf.mxu0
    %v656 = vpop.f32.mrf.mxu0
    %v657 = vadd.f32 0.0, %v656
    %v658 = vpop.f32.mrf.mxu0
    %659 = vmatprep.mubr.bf16.mxu0 %v458
    %660 = vmatmul.mubr.bf16.gmra.mxu0 %v457
    %v661 = vpop.f32.mrf.mxu0
    %v662 = vadd.f32 0.0, %v661
    %v663 = vpop.f32.mrf.mxu0
    %v664 = vpop.f32.mrf.mxu0
    %v665 = vadd.f32 0.0, %v664
    %v666 = vpop.f32.mrf.mxu0
    %667 = vmatprep.mubr.bf16.mxu0 %v460
    %668 = vmatmul.mubr.bf16.gmra.mxu0 %v459
    %v669 = vpop.f32.mrf.mxu0
    %v670 = vadd.f32 0.0, %v669
    %v671 = vpop.f32.mrf.mxu0
    %v672 = vpop.f32.mrf.mxu0
    %v673 = vadd.f32 0.0, %v672
    %v674 = vpop.f32.mrf.mxu0
    %675 = vmatprep.mubr.bf16.mxu0 %v462
    %676 = vmatmul.mubr.bf16.gmra.mxu0 %v461
    %v677 = vpop.f32.mrf.mxu0
    %v678 = vadd.f32 0.0, %v677
    %v679 = vpop.f32.mrf.mxu0
    %v680 = vpop.f32.mrf.mxu0
    %v681 = vadd.f32 0.0, %v680
    %v682 = vpop.f32.mrf.mxu0
    %683 = vmatprep.mubr.bf16.mxu0 %v464
    %684 = vmatmul.mubr.bf16.gmra.mxu0 %v463
    %v685 = vpop.f32.mrf.mxu0
    %v686 = vadd.f32 0.0, %v685
    %v687 = vpop.f32.mrf.mxu0
    %v688 = vpop.f32.mrf.mxu0
    %v689 = vadd.f32 0.0, %v688
    %v690 = vpop.f32.mrf.mxu0
    %691 = vmatprep.mubr.bf16.mxu0 %v466
    %692 = vmatmul.mubr.bf16.gmra.mxu0 %v465
    %v693 = vpop.f32.mrf.mxu0
    %v694 = vadd.f32 0.0, %v693
    %v695 = vpop.f32.mrf.mxu0
    %v696 = vpop.f32.mrf.mxu0
    %v697 = vadd.f32 0.0, %v696
    %v698 = vpop.f32.mrf.mxu0
    %699 = vmatprep.mubr.bf16.mxu0 %v468
    %700 = vmatmul.mubr.bf16.gmra.mxu0 %v467
    %v701 = vpop.f32.mrf.mxu0
    %v702 = vadd.f32 0.0, %v701
    %v703 = vpop.f32.mrf.mxu0
    %v704 = vpop.f32.mrf.mxu0
    %v705 = vadd.f32 0.0, %v704
    %v706 = vpop.f32.mrf.mxu0
    %707 = vmatprep.mubr.bf16.mxu0 %v470
    %708 = vmatmul.mubr.bf16.gmra.mxu0 %v469
    %v709 = vpop.f32.mrf.mxu0
    %v710 = vadd.f32 0.0, %v709
    %v711 = vpop.f32.mrf.mxu0
    %v712 = vpop.f32.mrf.mxu0
    %v713 = vadd.f32 0.0, %v712
    %v714 = vpop.f32.mrf.mxu0
    %715 = vmatprep.mubr.bf16.mxu0 %v472
    %716 = vmatmul.mubr.bf16.gmra.mxu0 %v471
    %v717 = vpop.f32.mrf.mxu0
    %v718 = vadd.f32 0.0, %v717
    %v719 = vpop.f32.mrf.mxu0
    %v720 = vpop.f32.mrf.mxu0
    %v721 = vadd.f32 0.0, %v720
    %v722 = vpop.f32.mrf.mxu0
    %723 = vmatprep.mubr.bf16.mxu0 %v474
    %724 = vmatmul.mubr.bf16.gmra.mxu0 %v473
    %v725 = vpop.f32.mrf.mxu0
    %v726 = vadd.f32 0.0, %v725
    %v727 = vpop.f32.mrf.mxu0
    %v728 = vpop.f32.mrf.mxu0
    %v729 = vadd.f32 0.0, %v728
    %v730 = vpop.f32.mrf.mxu0
    %731 = vdwg.mxu0
    %v732 = vpack.c.bf16 %v609, %v606
    %v733 = vpack.c.bf16 %v617, %v614
    %v734 = vpack.c.bf16 %v625, %v622
    %v735 = vpack.c.bf16 %v633, %v630
    %v736 = vpack.c.bf16 %v641, %v638
    %v737 = vpack.c.bf16 %v649, %v646
    %v738 = vpack.c.bf16 %v657, %v654
    %v739 = vpack.c.bf16 %v665, %v662
    %v740 = vpack.c.bf16 %v673, %v670
    %v741 = vpack.c.bf16 %v681, %v678
    %v742 = vpack.c.bf16 %v689, %v686
    %v743 = vpack.c.bf16 %v697, %v694
    %v744 = vpack.c.bf16 %v705, %v702
    %v745 = vpack.c.bf16 %v713, %v710
    %v746 = vpack.c.bf16 %v721, %v718
    %v747 = vpack.c.bf16 %v729, %v726
    %v748 = vld [vmem:[%s6] sm:$0x1]
    %v750 = vlaneseq
    %v751 = vshrl.u32 %v750, 7
    %v752 = vsub.s32 0, %v751
    %v753 = vrot.slane %v246, %v752
    %v754 = vlaneseq
    %v755 = vshrl.u32 %v754, 7
    %v756 = vsub.s32 1, %v755
    %v757 = vrot.slane %v246, %v756
    %v760 = vpack.c.bf16 %v753, %v753
    %v761 = vpack.c.bf16 %v757, %v757
    %762 = vmatprep.subr.bf16.mxu0 0
    %763 = vmatpush1.bf16.msra.mxu0 %v546
    %764 = vmatprep.subr.bf16.mxu0 0
    %765 = vmatpush1.bf16.msra.mxu0 %v545
    %766 = vmatprep.subr.bf16.mxu0 0
    %767 = vmatpush1.bf16.msra.mxu0 %v544
    %768 = vmatprep.subr.bf16.mxu0 0
    %769 = vmatpush1.bf16.msra.mxu0 %v543
    %770 = vmatprep.subr.bf16.mxu0 0
    %771 = vmatpush1.bf16.msra.mxu0 %v542
    %772 = vmatprep.subr.bf16.mxu0 0
    %773 = vmatpush1.bf16.msra.mxu0 %v541
    %774 = vmatprep.subr.bf16.mxu0 0
    %775 = vmatpush1.bf16.msra.mxu0 %v540
    %776 = vmatprep.subr.bf16.mxu0 0
    %777 = vmatpush1.bf16.msra.mxu0 %v539
    %778 = vmatprep.subr.bf16.mxu0 0
    %779 = vmatpush2.bf16.msra.mxu0 %v554
    %780 = vmatprep.subr.bf16.mxu0 0
    %781 = vmatpush2.bf16.msra.mxu0 %v553
    %782 = vmatprep.subr.bf16.mxu0 0
    %783 = vmatpush2.bf16.msra.mxu0 %v552
    %784 = vmatprep.subr.bf16.mxu0 0
    %785 = vmatpush2.bf16.msra.mxu0 %v551
    %786 = vmatprep.subr.bf16.mxu0 0
    %787 = vmatpush2.bf16.msra.mxu0 %v550
    %788 = vmatprep.subr.bf16.mxu0 0
    %789 = vmatpush2.bf16.msra.mxu0 %v549
    %790 = vmatprep.subr.bf16.mxu0 0
    %791 = vmatpush2.bf16.msra.mxu0 %v548
    %792 = vmatprep.subr.bf16.mxu0 0
    %793 = vmatpush2.bf16.msra.mxu0 %v547
    %794 = vmatprep.mubr.bf16.mxu0 %v761
    %795 = vmatmul.mubr.bf16.gmra.mxu0 %v760
    %v796 = vpop.f32.mrf.mxu0
    %v797 = vadd.f32 0.0, %v796
    %v798 = vpop.f32.mrf.mxu0
    %v799 = vpop.f32.mrf.mxu0
    %v800 = vpop.f32.mrf.mxu0
    %801 = vdwg.mxu0
    %v802 = vadd.f32 %v748, %v797
    %v803 = vpack.c.bf16 %v147, %v147
    %v804 = vpack.c.bf16 %v148, %v148
    %v806 = vlaneseq
    %v807 = vshrl.u32 %v806, 7
    %v808 = vsub.s32 0, %v807
    %v809 = vrot.slane %v802, %v808
    %811 = vmatprep.subr.bf16.mxu0 0
    %812 = vmatpush1.bf16.msra.mxu0 %v739
    %813 = vmatprep.subr.bf16.mxu0 0
    %814 = vmatpush1.bf16.msra.mxu0 %v738
    %815 = vmatprep.subr.bf16.mxu0 0
    %816 = vmatpush1.bf16.msra.mxu0 %v737
    %817 = vmatprep.subr.bf16.mxu0 0
    %818 = vmatpush1.bf16.msra.mxu0 %v736
    %819 = vmatprep.subr.bf16.mxu0 0
    %820 = vmatpush1.bf16.msra.mxu0 %v735
    %821 = vmatprep.subr.bf16.mxu0 0
    %822 = vmatpush1.bf16.msra.mxu0 %v734
    %823 = vmatprep.subr.bf16.mxu0 0
    %824 = vmatpush1.bf16.msra.mxu0 %v733
    %825 = vmatprep.subr.bf16.mxu0 0
    %826 = vmatpush1.bf16.msra.mxu0 %v732
    %827 = vmatprep.subr.bf16.mxu0 0
    %828 = vmatpush2.bf16.msra.mxu0 %v747
    %829 = vmatprep.subr.bf16.mxu0 0
    %830 = vmatpush2.bf16.msra.mxu0 %v746
    %831 = vmatprep.subr.bf16.mxu0 0
    %832 = vmatpush2.bf16.msra.mxu0 %v745
    %833 = vmatprep.subr.bf16.mxu0 0
    %834 = vmatpush2.bf16.msra.mxu0 %v744
    %835 = vmatprep.subr.bf16.mxu0 0
    %836 = vmatpush2.bf16.msra.mxu0 %v743
    %837 = vmatprep.subr.bf16.mxu0 0
    %838 = vmatpush2.bf16.msra.mxu0 %v742
    %839 = vmatprep.subr.bf16.mxu0 0
    %840 = vmatpush2.bf16.msra.mxu0 %v741
    %841 = vmatprep.subr.bf16.mxu0 0
    %842 = vmatpush2.bf16.msra.mxu0 %v740
    %843 = vmatprep.mubr.bf16.mxu0 %v804
    %844 = vmatmul.mubr.bf16.gmra.mxu0 %v803
    %v845 = vpop.f32.mrf.mxu0
    %v846 = vadd.f32 %v809, %v845
    %v847 = vpop.f32.mrf.mxu0
    %v848 = vpop.f32.mrf.mxu0
    %v849 = vpop.f32.mrf.mxu0
    %850 = vdwg.mxu0
    %v851 = vmax.f32 %v846, 0.0
    %v852 = vsel %vm149, %v851, 0.0
    %v853 = vrot.slane %v852, 4
    %v854 = vadd.f32 %v852, %v853
    %v855 = vrot.slane %v854, 2
    %v856 = vadd.f32 %v854, %v855
    %v857 = vrot.slane %v856, 1
    %v858 = vadd.f32 %v856, %v857
    %v859 = vmul.f32 %v858, 0.5
    %v860 = vmul.f32 %v851, %v851
    %v861 = vsel %vm149, %v860, 0.0
    %v862 = vrot.slane %v861, 4
    %v863 = vadd.f32 %v861, %v862
    %v864 = vrot.slane %v863, 2
    %v865 = vadd.f32 %v863, %v864
    %v866 = vrot.slane %v865, 1
    %v867 = vadd.f32 %v865, %v866
    %v868 = vmul.f32 %v867, 0.5
    %v869 = vmul.f32 %v859, %v859
    %v870 = vsub.f32 %v868, %v869
    %v871 = vmax.f32 %v870, 0.0
    %v872 = vld [vmem:[%s7] sm:$0x1]
    %v873 = vadd.f32 %v871, 1e-05
    %v874 = vrsqrt.pop %v873
    %v875 = vmul.f32 %v872, %v874
    %v876 = vld [vmem:[%s8] sm:$0x1]
    %v877 = vmul.f32 %v859, %v875
    %v878 = vsub.f32 %v876, %v877
    %v879 = vld [vmem:[%s9] sm:$0xf]
    %v880 = vld [vmem:[%s9 + $0x4] sm:$0xf]
    %v881 = vld [vmem:[%s9 + $0x8] sm:$0xf]
    %v882 = vld [vmem:[%s9 + $0xc] sm:$0xf]
    %v883 = vld [vmem:[%s9 + $0x10] sm:$0xf]
    %v884 = vld [vmem:[%s9 + $0x14] sm:$0xf]
    %v885 = vld [vmem:[%s9 + $0x18] sm:$0xf]
    %v886 = vld [vmem:[%s9 + $0x1c] sm:$0xf]
    %v887 = vld [vmem:[%s9 + $0x20] sm:$0xf]
    %v888 = vld [vmem:[%s9 + $0x24] sm:$0xf]
    %v889 = vld [vmem:[%s9 + $0x28] sm:$0xf]
    %v890 = vld [vmem:[%s9 + $0x2c] sm:$0xf]
    %v891 = vld [vmem:[%s9 + $0x30] sm:$0xf]
    %v892 = vld [vmem:[%s9 + $0x34] sm:$0xf]
    %v893 = vld [vmem:[%s9 + $0x38] sm:$0xf]
    %v894 = vld [vmem:[%s9 + $0x3c] sm:$0xf]
    %v896 = vlaneseq
    %v897 = vshrl.u32 %v896, 7
    %v898 = vsub.s32 0, %v897
    %v899 = vrot.slane %v875, %v898
    %v901 = vsel %vm315, %v899, 0.0
    %v902 = vsel %vm317, %v899, 0.0
    %v903 = vsel %vm319, %v899, 0.0
    %v904 = vsel %vm321, %v899, 0.0
    %v905 = vsel %vm323, %v899, 0.0
    %v906 = vsel %vm325, %v899, 0.0
    %v907 = vsel %vm327, %v899, 0.0
    %v908 = vsel %vm329, %v899, 0.0
    %v909 = vsel %vm331, %v899, 0.0
    %v910 = vsel %vm333, %v899, 0.0
    %v911 = vsel %vm335, %v899, 0.0
    %v912 = vsel %vm337, %v899, 0.0
    %v913 = vsel %vm339, %v899, 0.0
    %v914 = vsel %vm341, %v899, 0.0
    %v915 = vsel %vm343, %v899, 0.0
    %v916 = vsel %vm345, %v899, 0.0
    %v917 = vpack.c.bf16 %v902, %v901
    %v918 = vpack.c.bf16 %v904, %v903
    %v919 = vpack.c.bf16 %v906, %v905
    %v920 = vpack.c.bf16 %v908, %v907
    %v921 = vpack.c.bf16 %v910, %v909
    %v922 = vpack.c.bf16 %v912, %v911
    %v923 = vpack.c.bf16 %v914, %v913
    %v924 = vpack.c.bf16 %v916, %v915
    %v941 = vunpack.c.l.b16 %v879
    %v942 = vunpack.c.l.b16 %v880
    %v943 = vunpack.c.l.b16 %v881
    %v944 = vunpack.c.l.b16 %v882
    %v945 = vunpack.c.l.b16 %v883
    %v946 = vunpack.c.l.b16 %v884
    %v947 = vunpack.c.l.b16 %v885
    %v948 = vunpack.c.l.b16 %v886
    %v949 = vunpack.c.l.b16 %v887
    %v950 = vunpack.c.l.b16 %v888
    %v951 = vunpack.c.l.b16 %v889
    %v952 = vunpack.c.l.b16 %v890
    %v953 = vunpack.c.l.b16 %v891
    %v954 = vunpack.c.l.b16 %v892
    %v955 = vunpack.c.l.b16 %v893
    %v956 = vunpack.c.l.b16 %v894
    %v957 = vpack.c.b16 %v942, %v941
    %v958 = vpack.c.b16 %v944, %v943
    %v959 = vpack.c.b16 %v946, %v945
    %v960 = vpack.c.b16 %v948, %v947
    %v961 = vpack.c.b16 %v950, %v949
    %v962 = vpack.c.b16 %v952, %v951
    %v963 = vpack.c.b16 %v954, %v953
    %v964 = vpack.c.b16 %v956, %v955
    %973 = vmatprep.subr.bf16.mxu0 0
    %974 = vmatpush1.bf16.msra.mxu0 %v964
    %975 = vmatprep.subr.bf16.mxu0 0
    %976 = vmatpush1.bf16.msra.mxu0 %v963
    %977 = vmatprep.subr.bf16.mxu0 0
    %978 = vmatpush1.bf16.msra.mxu0 %v962
    %979 = vmatprep.subr.bf16.mxu0 0
    %980 = vmatpush1.bf16.msra.mxu0 %v961
    %981 = vmatprep.subr.bf16.mxu0 0
    %982 = vmatpush1.bf16.msra.mxu0 %v960
    %983 = vmatprep.subr.bf16.mxu0 0
    %984 = vmatpush1.bf16.msra.mxu0 %v959
    %985 = vmatprep.subr.bf16.mxu0 0
    %986 = vmatpush1.bf16.msra.mxu0 %v958
    %987 = vmatprep.subr.bf16.mxu0 0
    %988 = vmatpush1.bf16.msra.mxu0 %v957
    %989 = vmatprep.subr.bf16.mxu0 0
    %990 = vmatpush2.bf16.msra.mxu0 0
    %991 = vmatprep.subr.bf16.mxu0 0
    %992 = vmatpush2.bf16.msra.mxu0 0
    %993 = vmatprep.subr.bf16.mxu0 0
    %994 = vmatpush2.bf16.msra.mxu0 0
    %995 = vmatprep.subr.bf16.mxu0 0
    %996 = vmatpush2.bf16.msra.mxu0 0
    %997 = vmatprep.subr.bf16.mxu0 0
    %998 = vmatpush2.bf16.msra.mxu0 0
    %999 = vmatprep.subr.bf16.mxu0 0
    %1000 = vmatpush2.bf16.msra.mxu0 0
    %1001 = vmatprep.subr.bf16.mxu0 0
    %1002 = vmatpush2.bf16.msra.mxu0 0
    %1003 = vmatprep.subr.bf16.mxu0 0
    %1004 = vmatpush2.bf16.msra.mxu0 0
    %1005 = vmatprep.mubr.bf16.mxu0 0
    %1006 = vmatmul.mubr.bf16.gmra.mxu0 %v917
    %v1007 = vpop.f32.mrf.mxu0
    %v1008 = vadd.f32 0.0, %v1007
    %v1009 = vpop.f32.mrf.mxu0
    %v1010 = vpop.f32.mrf.mxu0
    %v1011 = vadd.f32 0.0, %v1010
    %v1012 = vpop.f32.mrf.mxu0
    %1013 = vmatprep.mubr.bf16.mxu0 0
    %1014 = vmatmul.mubr.bf16.gmra.mxu0 %v918
    %v1015 = vpop.f32.mrf.mxu0
    %v1016 = vadd.f32 0.0, %v1015
    %v1017 = vpop.f32.mrf.mxu0
    %v1018 = vpop.f32.mrf.mxu0
    %v1019 = vadd.f32 0.0, %v1018
    %v1020 = vpop.f32.mrf.mxu0
    %1021 = vmatprep.mubr.bf16.mxu0 0
    %1022 = vmatmul.mubr.bf16.gmra.mxu0 %v919
    %v1023 = vpop.f32.mrf.mxu0
    %v1024 = vadd.f32 0.0, %v1023
    %v1025 = vpop.f32.mrf.mxu0
    %v1026 = vpop.f32.mrf.mxu0
    %v1027 = vadd.f32 0.0, %v1026
    %v1028 = vpop.f32.mrf.mxu0
    %1029 = vmatprep.mubr.bf16.mxu0 0
    %1030 = vmatmul.mubr.bf16.gmra.mxu0 %v920
    %v1031 = vpop.f32.mrf.mxu0
    %v1032 = vadd.f32 0.0, %v1031
    %v1033 = vpop.f32.mrf.mxu0
    %v1034 = vpop.f32.mrf.mxu0
    %v1035 = vadd.f32 0.0, %v1034
    %v1036 = vpop.f32.mrf.mxu0
    %1037 = vmatprep.mubr.bf16.mxu0 0
    %1038 = vmatmul.mubr.bf16.gmra.mxu0 %v921
    %v1039 = vpop.f32.mrf.mxu0
    %v1040 = vadd.f32 0.0, %v1039
    %v1041 = vpop.f32.mrf.mxu0
    %v1042 = vpop.f32.mrf.mxu0
    %v1043 = vadd.f32 0.0, %v1042
    %v1044 = vpop.f32.mrf.mxu0
    %1045 = vmatprep.mubr.bf16.mxu0 0
    %1046 = vmatmul.mubr.bf16.gmra.mxu0 %v922
    %v1047 = vpop.f32.mrf.mxu0
    %v1048 = vadd.f32 0.0, %v1047
    %v1049 = vpop.f32.mrf.mxu0
    %v1050 = vpop.f32.mrf.mxu0
    %v1051 = vadd.f32 0.0, %v1050
    %v1052 = vpop.f32.mrf.mxu0
    %1053 = vmatprep.mubr.bf16.mxu0 0
    %1054 = vmatmul.mubr.bf16.gmra.mxu0 %v923
    %v1055 = vpop.f32.mrf.mxu0
    %v1056 = vadd.f32 0.0, %v1055
    %v1057 = vpop.f32.mrf.mxu0
    %v1058 = vpop.f32.mrf.mxu0
    %v1059 = vadd.f32 0.0, %v1058
    %v1060 = vpop.f32.mrf.mxu0
    %1061 = vmatprep.mubr.bf16.mxu0 0
    %1062 = vmatmul.mubr.bf16.gmra.mxu0 %v924
    %v1063 = vpop.f32.mrf.mxu0
    %v1064 = vadd.f32 0.0, %v1063
    %v1065 = vpop.f32.mrf.mxu0
    %v1066 = vpop.f32.mrf.mxu0
    %v1067 = vadd.f32 0.0, %v1066
    %v1068 = vpop.f32.mrf.mxu0
    %1069 = vdwg.mxu0
    %v1070 = vpack.c.bf16 %v1011, %v1008
    %v1071 = vpack.c.bf16 %v1019, %v1016
    %v1072 = vpack.c.bf16 %v1027, %v1024
    %v1073 = vpack.c.bf16 %v1035, %v1032
    %v1074 = vpack.c.bf16 %v1043, %v1040
    %v1075 = vpack.c.bf16 %v1051, %v1048
    %v1076 = vpack.c.bf16 %v1059, %v1056
    %v1077 = vpack.c.bf16 %v1067, %v1064
    %v1078 = vld [vmem:[%s10] sm:$0x1]
    %v1079 = vpack.c.bf16 %v878, %v878
    %1080 = vmatprep.subr.bf16.mxu0 0
    %1081 = vmatpush1.bf16.msra.mxu0 %v964
    %1082 = vmatprep.subr.bf16.mxu0 0
    %1083 = vmatpush1.bf16.msra.mxu0 %v963
    %1084 = vmatprep.subr.bf16.mxu0 0
    %1085 = vmatpush1.bf16.msra.mxu0 %v962
    %1086 = vmatprep.subr.bf16.mxu0 0
    %1087 = vmatpush1.bf16.msra.mxu0 %v961
    %1088 = vmatprep.subr.bf16.mxu0 0
    %1089 = vmatpush1.bf16.msra.mxu0 %v960
    %1090 = vmatprep.subr.bf16.mxu0 0
    %1091 = vmatpush1.bf16.msra.mxu0 %v959
    %1092 = vmatprep.subr.bf16.mxu0 0
    %1093 = vmatpush1.bf16.msra.mxu0 %v958
    %1094 = vmatprep.subr.bf16.mxu0 0
    %1095 = vmatpush1.bf16.msra.mxu0 %v957
    %1096 = vmatprep.subr.bf16.mxu0 0
    %1097 = vmatpush2.bf16.msra.mxu0 0
    %1098 = vmatprep.subr.bf16.mxu0 0
    %1099 = vmatpush2.bf16.msra.mxu0 0
    %1100 = vmatprep.subr.bf16.mxu0 0
    %1101 = vmatpush2.bf16.msra.mxu0 0
    %1102 = vmatprep.subr.bf16.mxu0 0
    %1103 = vmatpush2.bf16.msra.mxu0 0
    %1104 = vmatprep.subr.bf16.mxu0 0
    %1105 = vmatpush2.bf16.msra.mxu0 0
    %1106 = vmatprep.subr.bf16.mxu0 0
    %1107 = vmatpush2.bf16.msra.mxu0 0
    %1108 = vmatprep.subr.bf16.mxu0 0
    %1109 = vmatpush2.bf16.msra.mxu0 0
    %1110 = vmatprep.subr.bf16.mxu0 0
    %1111 = vmatpush2.bf16.msra.mxu0 0
    %1112 = vmatprep.mubr.bf16.mxu0 0
    %1113 = vmatmul.mubr.bf16.gmra.mxu0 %v1079
    %v1114 = vpop.f32.mrf.mxu0
    %v1115 = vadd.f32 0.0, %v1114
    %v1116 = vpop.f32.mrf.mxu0
    %v1117 = vpop.f32.mrf.mxu0
    %v1118 = vpop.f32.mrf.mxu0
    %1119 = vdwg.mxu0
    %v1120 = vadd.f32 %v1078, %v1115
    %v1121 = vpack.c.bf16 %v851, %v851
    %v1123 = vlaneseq
    %v1124 = vshrl.u32 %v1123, 7
    %v1125 = vsub.s32 0, %v1124
    %v1126 = vrot.slane %v1120, %v1125
    %1128 = vmatprep.subr.bf16.mxu0 0
    %1129 = vmatpush1.bf16.msra.mxu0 %v1077
    %1130 = vmatprep.subr.bf16.mxu0 0
    %1131 = vmatpush1.bf16.msra.mxu0 %v1076
    %1132 = vmatprep.subr.bf16.mxu0 0
    %1133 = vmatpush1.bf16.msra.mxu0 %v1075
    %1134 = vmatprep.subr.bf16.mxu0 0
    %1135 = vmatpush1.bf16.msra.mxu0 %v1074
    %1136 = vmatprep.subr.bf16.mxu0 0
    %1137 = vmatpush1.bf16.msra.mxu0 %v1073
    %1138 = vmatprep.subr.bf16.mxu0 0
    %1139 = vmatpush1.bf16.msra.mxu0 %v1072
    %1140 = vmatprep.subr.bf16.mxu0 0
    %1141 = vmatpush1.bf16.msra.mxu0 %v1071
    %1142 = vmatprep.subr.bf16.mxu0 0
    %1143 = vmatpush1.bf16.msra.mxu0 %v1070
    %1144 = vmatprep.subr.bf16.mxu0 0
    %1145 = vmatpush2.bf16.msra.mxu0 0
    %1146 = vmatprep.subr.bf16.mxu0 0
    %1147 = vmatpush2.bf16.msra.mxu0 0
    %1148 = vmatprep.subr.bf16.mxu0 0
    %1149 = vmatpush2.bf16.msra.mxu0 0
    %1150 = vmatprep.subr.bf16.mxu0 0
    %1151 = vmatpush2.bf16.msra.mxu0 0
    %1152 = vmatprep.subr.bf16.mxu0 0
    %1153 = vmatpush2.bf16.msra.mxu0 0
    %1154 = vmatprep.subr.bf16.mxu0 0
    %1155 = vmatpush2.bf16.msra.mxu0 0
    %1156 = vmatprep.subr.bf16.mxu0 0
    %1157 = vmatpush2.bf16.msra.mxu0 0
    %1158 = vmatprep.subr.bf16.mxu0 0
    %1159 = vmatpush2.bf16.msra.mxu0 0
    %1160 = vmatprep.mubr.bf16.mxu0 0
    %1161 = vmatmul.mubr.bf16.gmra.mxu0 %v1121
    %v1162 = vpop.f32.mrf.mxu0
    %v1163 = vadd.f32 %v1126, %v1162
    %v1164 = vpop.f32.mrf.mxu0
    %v1165 = vpop.f32.mrf.mxu0
    %v1166 = vpop.f32.mrf.mxu0
    %1167 = vdwg.mxu0
    %vm1168 = vcmask 254976
    %1169 = vst.msk [vmem:[#allocation2] sm:$0x3] %vm1168, %v1163
    // Predicated region
    $region46: #{state_dimensionality_reducer.1} parent=1 // pred_check
      _
    $region47: #{state_dimensionality_reducer.1} parent=1 // pred_check_branch
      %1171 = sbr.rel (0) target = $region49
    $region48: #{state_dimensionality_reducer.1} parent=1 // pred_region
      %s1173 = ssub.s32 32, 32
      %1174 = vsyncadd [#allocation3], %s1173
      %s1176 = sshll.u32 [#allocation2], 4
      %s1177 = int_to_ptr.vmem [resolvable:$true] %s1176
      %1179 = dma.vmem_to_hbm [thread:$0]  %s1177, 32, %s11, [#allocation3]
    $region49: #{state_dimensionality_reducer.1} parent=1 // pred_fallthru
      _
    // Predicated region
    $region50: #{state_dimensionality_reducer.1} parent=1 // pred_check
      _
    $region51: #{state_dimensionality_reducer.1} parent=1 // pred_check_branch
      %1181 = sbr.rel (0) target = $region53
    $region52: #{state_dimensionality_reducer.1} parent=1 // pred_region
      %1182 = dma.done [#allocation3], 32
    $region53: #{state_dimensionality_reducer.1} parent=1 // pred_fallthru
      _
    %1183 = vsyncpa [#allocation3], 1

</llo_original>
